<compile_context>
chip_gen: v6e
topology: v6e:2x2x1
jax: 0.10.0
libtpu: 0.0.40
codegen_flags: <defaults>
</compile_context>

<pallas_src>
import jax
import jax.numpy as jnp
from jax.experimental import pallas as pl
from jax.experimental.pallas import tpu as pltpu


def _round_up(a: int, m: int) -> int:
    return ((a + m - 1) // m) * m


def _make_mlp_kernel(chunk: int):
    """Kernel over one (3, tm) batch block; walks `chunk`-lane sub-chunks."""

    def kernel(xt_ref, w1_ref, b1_ref, w2_ref, b2_ref, w3_ref, b3_ref, o_ref):
        # ---- hoisted, lane-invariant loads / slices (do NOT re-issue these
        # per chunk: JAX does not CSE broadcast_in_dim / slices). ----
        w1 = w1_ref[...]                       # (64, 3)  torch (out, in) layout
        w1_c0 = w1[:, 0:1]                     # (64, 1)
        w1_c1 = w1[:, 1:2]
        w1_c2 = w1[:, 2:3]
        b1 = b1_ref[...]                       # (64, 1)
        w2 = w2_ref[...]                       # (32, 64)
        b2 = b2_ref[...]                       # (32, 1)
        w3 = w3_ref[...]                       # (32, 1)
        b3 = b3_ref[0]                         # SMEM scalar

        n_chunks = xt_ref.shape[1] // chunk    # static

        def body(c, carry):
            start = pl.multiple_of(c * chunk, chunk)
            xt = xt_ref[:, pl.ds(start, chunk)]           # (3, chunk), batch on lanes

            # fc1 + ReLU: K=3 contraction as three broadcast FMAs on the VPU.
            # TODO(synk): if a bundle dump shows the VALU as the binding slot
            # after the tiling fix, move this onto the MXU (jnp.dot(w1, xt)),
            # which has ample slack here.
            h1 = (w1_c0 * xt[0:1, :]
                  + w1_c1 * xt[1:2, :]
                  + w1_c2 * xt[2:3, :]
                  + b1)                                    # (64, chunk)
            h1 = jnp.maximum(h1, 0.0)

            # fc2 + ReLU on the MXU: (32, 64) @ (64, chunk).
            h2 = jnp.dot(w2, h1, preferred_element_type=jnp.float32)
            h2 = jnp.maximum(h2 + b2, 0.0)                 # (32, chunk)

            # fc3 (single output unit): sublane reduction on the XLU + SMEM bias.
            h3 = jnp.sum(w3 * h2, axis=0, keepdims=True) + b3   # (1, chunk)

            # Exact, numerically stable sigmoid: sigma(x) = 1/(1+e^-|x|) for x>=0,
            # e^-|x|/(1+e^-|x|) for x<0. No overflow, no approx-reciprocal error.
            z = jnp.exp(-jnp.abs(h3))
            inv = 1.0 / (1.0 + z)
            sig = jnp.where(h3 >= 0.0, inv, z * inv)

            # Lane-dense store (unmasked vst: chunk is a multiple of 128 lanes).
            o_ref[:, pl.ds(start, chunk)] = sig.astype(o_ref.dtype)
            return carry

        jax.lax.fori_loop(0, n_chunks, body, 0, unroll=True)

    return kernel


def disruption_predictor(x, params, *, block_batch=2048, lane_chunk=256,
                         features_first=False, lane_dense_out=False):
    """Fused 3 -> 64 -> 32 -> 1 MLP with ReLU, ReLU, sigmoid.

    x: (B, 3) float32 by default; pass (3, B) with features_first=True to skip
       the wrapper pad+transpose HBM round trip.
    Returns (B, 1) float32 by default; lane_dense_out=True returns the raw
    (1, B_pad) lane-dense slab (caller slices [:, :B]) and avoids one copy.
    """
    w1, b1, w2, b2, w3, b3 = params
    if features_first:
        assert x.shape[0] == 3, x.shape
        B = x.shape[1]
    else:
        assert x.shape[1] == 3, x.shape
        B = x.shape[0]

    # --- block-size selection ------------------------------------------------
    # Lane-aligned and large (amortise per-grid-step overhead), but clamped so
    # there are >= 2 grid blocks whenever possible -> both v7x TensorCores are
    # used via the "parallel" dimension semantics.
    b128 = _round_up(max(B, 1), 128)
    two_block_tm = _round_up(pl.cdiv(b128, 2), 128)
    tm = max(128, min(_round_up(block_batch, 128), two_block_tm))
    lane_chunk = max(128, (lane_chunk // 128) * 128)
    if tm > lane_chunk:
        tm = _round_up(tm, lane_chunk)
    chunk = min(lane_chunk, tm)
    assert tm % chunk == 0

    b_pad = _round_up(max(B, 1), tm)
    n_blocks = b_pad // tm

    # --- input layout ----------------------------------------------------------
    if features_first:
        xt = jnp.pad(x, ((0, 0), (0, b_pad - B)))          # already (3, B)
    else:
        # Layout plumbing required by the (B, 3) module interface. Padded rows
        # are zeros (finite everywhere downstream) and are sliced off at the end.
        xt = jnp.pad(x, ((0, b_pad - B), (0, 0))).T         # (3, B_pad)

    def whole(a):
        return pl.BlockSpec(a.shape, lambda i, n=a.ndim: (0,) * n)

    out = pl.pallas_call(
        _make_mlp_kernel(chunk),
        out_shape=jax.ShapeDtypeStruct((1, b_pad), jnp.float32),
        grid_spec=pltpu.PrefetchScalarGridSpec(
            num_scalar_prefetch=0,
            grid=(n_blocks,),
            in_specs=[
                pl.BlockSpec((3, tm), lambda i: (0, i)),            # x tile (3, tm)
                whole(w1),                                          # (64, 3)
                whole(b1),                                          # (64, 1)
                whole(w2),                                          # (32, 64)
                whole(b2),                                          # (32, 1)
                whole(w3),                                          # (32, 1)
                pl.BlockSpec(memory_space=pltpu.MemorySpace.SMEM),  # b3 scalar
            ],
            out_specs=pl.BlockSpec((1, tm), lambda i: (0, i)),      # lane-dense
        ),
        compiler_params=pltpu.CompilerParams(
            dimension_semantics=("parallel",),
        ),
    )(xt, w1, b1, w2, b2, w3, b3)

    if lane_dense_out:
        return out                          # (1, B_pad); caller slices [:, :B]
    # (1, B_pad) -> (B, 1) to match the nn.Module interface (one extra copy;
    # pass lane_dense_out=True to avoid it).
    return out[0, :B].reshape(B, 1)


def init_params(key):
    """PyTorch nn.Linear default init U(-1/sqrt(fan_in), +), in kernel layout:
       weights (out, in) (torch layout), biases as columns (out, 1);
       w3 pre-transposed to (32, 1); b3 as a flat (1,) scalar for SMEM."""

    def uniform(k, shape, fan_in):
        bound = 1.0 / jnp.sqrt(float(fan_in))
        return jax.random.uniform(k, shape, jnp.float32, -bound, bound)

    ks = jax.random.split(key, 6)
    w1 = uniform(ks[0], (64, 3), 3)
    b1 = uniform(ks[1], (64, 1), 3)
    w2 = uniform(ks[2], (32, 64), 64)
    b2 = uniform(ks[3], (32, 1), 64)
    w3 = uniform(ks[4], (32, 1), 32)
    b3 = uniform(ks[5], (1,), 32)
    return (w1, b1, w2, b2, w3, b3)


def _reference(x, params):
    w1, b1, w2, b2, w3, b3 = params
    h = jnp.maximum(x @ w1.T + b1[:, 0], 0.0)
    h = jnp.maximum(h @ w2.T + b2[:, 0], 0.0)
    return jax.nn.sigmoid(h @ w3 + b3)


if __name__ == "__main__":
    key = jax.random.PRNGKey(0)
    kx, kp = jax.random.split(key)
    params = init_params(kp)

    # Small shapes: tiny batch (single 128 block), a single-block batch, and a
    # non-multiple batch that exercises padding + 2 grid blocks + the unrolled
    # 256-lane chunk loop.
    for B in (2, 100, 1000):
        xb = jax.random.normal(jax.random.fold_in(kx, B), (B, 3), dtype=jnp.float32)
        out = jax.block_until_ready(disruption_predictor(xb, params))
        ref = _reference(xb, params)
        assert out.shape == (B, 1)
        err = float(jnp.max(jnp.abs(out - ref)))
        assert err < 1e-4, f"B={B}: max abs error {err}"

    # Exercise the relayout-free paths (review items 3 & 4).
    B = 1000
    xb = jax.random.normal(jax.random.fold_in(kx, B), (B, 3), dtype=jnp.float32)
    out = disruption_predictor(xb, params)
    out_ff = jax.block_until_ready(
        disruption_predictor(xb.T, params, features_first=True))
    assert float(jnp.max(jnp.abs(out_ff - out))) < 1e-6
    slab = jax.block_until_ready(
        disruption_predictor(xb, params, lane_dense_out=True))
    assert float(jnp.max(jnp.abs(slab[0, :B] - out[:, 0]))) < 1e-6

    print("KERNEL_OK")
</pallas_src>

<mosaic_0001>
module attributes {stable_mosaic.version = 11 : i64} {
  func.func @kernel(%arg0: i32, %arg1: memref<3x128xf32, #tpu.memory_space<vmem>>, %arg2: memref<64x3xf32, #tpu.memory_space<vmem>>, %arg3: memref<64x1xf32, #tpu.memory_space<vmem>>, %arg4: memref<32x64xf32, #tpu.memory_space<vmem>>, %arg5: memref<32x1xf32, #tpu.memory_space<vmem>>, %arg6: memref<32x1xf32, #tpu.memory_space<vmem>>, %arg7: memref<1xf32, #tpu.memory_space<smem>>, %arg8: memref<1x128xf32, #tpu.memory_space<vmem>>) attributes {dimension_semantics = [#tpu.dimension_semantics<parallel>], iteration_bounds = array<i64: 1>, scalar_prefetch = 0 : i64, scratch_operands = 0 : i64, tpu.core_type = #tpu.core_type<tc>, window_params = [{transform_indices = @transform_0, window_bounds = array<i64: 3, 128>}, {pipeline_mode = #tpu.pipeline_mode<synchronous>, transform_indices = @transform_1, window_bounds = array<i64: 64, 3>}, {pipeline_mode = #tpu.pipeline_mode<synchronous>, transform_indices = @transform_2, window_bounds = array<i64: 64, 1>}, {pipeline_mode = #tpu.pipeline_mode<synchronous>, transform_indices = @transform_3, window_bounds = array<i64: 32, 64>}, {pipeline_mode = #tpu.pipeline_mode<synchronous>, transform_indices = @transform_4, window_bounds = array<i64: 32, 1>}, {pipeline_mode = #tpu.pipeline_mode<synchronous>, transform_indices = @transform_5, window_bounds = array<i64: 32, 1>}, {transform_indices = @transform_6, window_bounds = array<i64: 1>}, {transform_indices = @transform_7, window_bounds = array<i64: 1, 128>}]} {
    %c0 = arith.constant 0 : index
    %c0_0 = arith.constant 0 : index
    %0 = vector.load %arg2[%c0, %c0_0] : memref<64x3xf32, #tpu.memory_space<vmem>>, vector<64x3xf32>
    %1 = vector.extract_strided_slice %0 {offsets = [0, 0], sizes = [64, 1], strides = [1, 1]} : vector<64x3xf32> to vector<64x1xf32>
    %2 = vector.extract_strided_slice %0 {offsets = [0, 1], sizes = [64, 1], strides = [1, 1]} : vector<64x3xf32> to vector<64x1xf32>
    %3 = vector.extract_strided_slice %0 {offsets = [0, 2], sizes = [64, 1], strides = [1, 1]} : vector<64x3xf32> to vector<64x1xf32>
    %c0_1 = arith.constant 0 : index
    %c0_2 = arith.constant 0 : index
    %4 = vector.load %arg3[%c0_1, %c0_2] : memref<64x1xf32, #tpu.memory_space<vmem>>, vector<64x1xf32>
    %c0_3 = arith.constant 0 : index
    %c0_4 = arith.constant 0 : index
    %5 = vector.load %arg4[%c0_3, %c0_4] : memref<32x64xf32, #tpu.memory_space<vmem>>, vector<32x64xf32>
    %c0_5 = arith.constant 0 : index
    %c0_6 = arith.constant 0 : index
    %6 = vector.load %arg5[%c0_5, %c0_6] : memref<32x1xf32, #tpu.memory_space<vmem>>, vector<32x1xf32>
    %c0_7 = arith.constant 0 : index
    %c0_8 = arith.constant 0 : index
    %7 = vector.load %arg6[%c0_7, %c0_8] : memref<32x1xf32, #tpu.memory_space<vmem>>, vector<32x1xf32>
    %c0_9 = arith.constant 0 : index
    %8 = memref.load %arg7[%c0_9] : memref<1xf32, #tpu.memory_space<smem>>
    %c0_i32 = arith.constant 0 : i32
    %c128_i32 = arith.constant 128 : i32
    %9 = arith.muli %c0_i32, %c128_i32 : i32
    %10 = tpu.assume_multiple %9, 128 : i32
    %c0_10 = arith.constant 0 : index
    %11 = arith.index_cast %10 : i32 to index
    %12 = vector.load %arg1[%c0_10, %11] : memref<3x128xf32, #tpu.memory_space<vmem>>, vector<3x128xf32>
    %13 = vector.extract_strided_slice %12 {offsets = [0, 0], sizes = [1, 128], strides = [1, 1]} : vector<3x128xf32> to vector<1x128xf32>
    %14 = vector.broadcast %1 : vector<64x1xf32> to vector<64x128xf32>
    %15 = vector.broadcast %13 : vector<1x128xf32> to vector<64x128xf32>
    %16 = arith.mulf %14, %15 : vector<64x128xf32>
    %17 = vector.extract_strided_slice %12 {offsets = [1, 0], sizes = [1, 128], strides = [1, 1]} : vector<3x128xf32> to vector<1x128xf32>
    %18 = vector.broadcast %2 : vector<64x1xf32> to vector<64x128xf32>
    %19 = vector.broadcast %17 : vector<1x128xf32> to vector<64x128xf32>
    %20 = arith.mulf %18, %19 : vector<64x128xf32>
    %21 = arith.addf %16, %20 : vector<64x128xf32>
    %22 = vector.extract_strided_slice %12 {offsets = [2, 0], sizes = [1, 128], strides = [1, 1]} : vector<3x128xf32> to vector<1x128xf32>
    %23 = vector.broadcast %3 : vector<64x1xf32> to vector<64x128xf32>
    %24 = vector.broadcast %22 : vector<1x128xf32> to vector<64x128xf32>
    %25 = arith.mulf %23, %24 : vector<64x128xf32>
    %26 = arith.addf %21, %25 : vector<64x128xf32>
    %27 = vector.broadcast %4 : vector<64x1xf32> to vector<64x128xf32>
    %28 = arith.addf %26, %27 : vector<64x128xf32>
    %cst = arith.constant 0.000000e+00 : f32
    %29 = vector.broadcast %cst : f32 to vector<64x128xf32>
    %30 = arith.maximumf %28, %29 : vector<64x128xf32>
    %cst_11 = arith.constant dense<0.000000e+00> : vector<32x128xf32>
    %31 = tpu.matmul %5, %30, %cst_11 {dimension_numbers = #tpu.dot_dimension_numbers<[1], [0], [0], [1], [0, 0, 1, 1], [], []>} : vector<32x64xf32>, vector<64x128xf32>, vector<32x128xf32> -> vector<32x128xf32>
    %32 = vector.broadcast %6 : vector<32x1xf32> to vector<32x128xf32>
    %33 = arith.addf %31, %32 : vector<32x128xf32>
    %cst_12 = arith.constant 0.000000e+00 : f32
    %34 = vector.broadcast %cst_12 : f32 to vector<32x128xf32>
    %35 = arith.maximumf %33, %34 : vector<32x128xf32>
    %36 = vector.broadcast %7 : vector<32x1xf32> to vector<32x128xf32>
    %37 = arith.mulf %36, %35 : vector<32x128xf32>
    %cst_13 = arith.constant dense<0.000000e+00> : vector<128xf32>
    %38 = vector.multi_reduction <add>, %37, %cst_13 [0] : vector<32x128xf32> to vector<128xf32>
    %39 = vector.shape_cast %38 : vector<128xf32> to vector<1x128xf32>
    %40 = vector.broadcast %8 : f32 to vector<1x128xf32>
    %41 = arith.addf %39, %40 : vector<1x128xf32>
    %42 = math.absf %41 : vector<1x128xf32>
    %cst_14 = arith.constant 0.000000e+00 : f32
    %43 = vector.broadcast %cst_14 : f32 to vector<1x128xf32>
    %44 = arith.subf %43, %42 : vector<1x128xf32>
    %45 = math.exp %44 : vector<1x128xf32>
    %cst_15 = arith.constant 1.000000e+00 : f32
    %46 = vector.broadcast %cst_15 : f32 to vector<1x128xf32>
    %47 = arith.addf %46, %45 : vector<1x128xf32>
    %cst_16 = arith.constant 1.000000e+00 : f32
    %48 = vector.broadcast %cst_16 : f32 to vector<1x128xf32>
    %49 = arith.divf %48, %47 : vector<1x128xf32>
    %cst_17 = arith.constant 0.000000e+00 : f32
    %50 = vector.broadcast %cst_17 : f32 to vector<1x128xf32>
    %51 = arith.cmpf oge, %41, %50 : vector<1x128xf32>
    %52 = arith.mulf %45, %49 : vector<1x128xf32>
    %53 = arith.select %51, %49, %52 : vector<1x128xi1>, vector<1x128xf32>
    %c0_18 = arith.constant 0 : index
    %54 = arith.index_cast %10 : i32 to index
    %55 = vector.load %arg8[%c0_18, %54] : memref<1x128xf32, #tpu.memory_space<vmem>>, vector<1x128xf32>
    tpu.vector_store %arg8[%c0_18, %54], %53 {strides = array<i32>} : memref<1x128xf32, #tpu.memory_space<vmem>>, vector<1x128xf32>,
    %c1_i32 = arith.constant 1 : i32
    return
  }
  func.func @transform_0(%arg0: i32) -> (i32, i32) {
    %c0_i32 = arith.constant 0 : i32
    %c0_i32_0 = arith.constant 0 : i32
    return %c0_i32, %arg0 : i32, i32
  }
  func.func @transform_1(%arg0: i32) -> (i32, i32) {
    %c0_i32 = arith.constant 0 : i32
    %c0_i32_0 = arith.constant 0 : i32
    %c0_i32_1 = arith.constant 0 : i32
    return %c0_i32, %c0_i32_0 : i32, i32
  }
  func.func @transform_2(%arg0: i32) -> (i32, i32) {
    %c0_i32 = arith.constant 0 : i32
    %c0_i32_0 = arith.constant 0 : i32
    %c0_i32_1 = arith.constant 0 : i32
    return %c0_i32, %c0_i32_0 : i32, i32
  }
  func.func @transform_3(%arg0: i32) -> (i32, i32) {
    %c0_i32 = arith.constant 0 : i32
    %c0_i32_0 = arith.constant 0 : i32
    %c0_i32_1 = arith.constant 0 : i32
    return %c0_i32, %c0_i32_0 : i32, i32
  }
  func.func @transform_4(%arg0: i32) -> (i32, i32) {
    %c0_i32 = arith.constant 0 : i32
    %c0_i32_0 = arith.constant 0 : i32
    %c0_i32_1 = arith.constant 0 : i32
    return %c0_i32, %c0_i32_0 : i32, i32
  }
  func.func @transform_5(%arg0: i32) -> (i32, i32) {
    %c0_i32 = arith.constant 0 : i32
    %c0_i32_0 = arith.constant 0 : i32
    %c0_i32_1 = arith.constant 0 : i32
    return %c0_i32, %c0_i32_0 : i32, i32
  }
  func.func @transform_6(%arg0: i32) -> i32 {
    %c0_i32 = arith.constant 0 : i32
    %c0_i32_0 = arith.constant 0 : i32
    return %c0_i32 : i32
  }
  func.func @transform_7(%arg0: i32) -> (i32, i32) {
    %c0_i32 = arith.constant 0 : i32
    %c0_i32_0 = arith.constant 0 : i32
    return %c0_i32, %arg0 : i32, i32
  }
}

</mosaic_0001>

<llo_original>
// kernel: tpu_custom_call.1
$region0: #{tpu_custom_call.1}
  #allocation0 [shape = 'u32[]', space=smem, size = 0x4, offset = 0x4, fixed_abs, tag = 'smem constant byte address 0x4 - core index']
  #allocation1 [shape = 'u32[144,128]{1,0:T(1,128)}', space=vmem, size = 0x12000, scoped, tag = 'internal scratch']
  #allocation2 [shape = 'f32[1]{0:T(128)S(6)}', space=smem, size = 0x200, scoped, tag = 'scoped memory for tpu_custom_call.1']
  %s0 = inlined_call_operand.vmem [shape: f32[3,128], index: 0, kind: input, shape index: {}]
  %s1 = inlined_call_operand.vmem [shape: f32[64,3], index: 1, kind: input, shape index: {}]
  %s2 = inlined_call_operand.vmem [shape: f32[64,1], index: 2, kind: input, shape index: {}]
  %s3 = inlined_call_operand.vmem [shape: f32[32,64], index: 3, kind: input, shape index: {}]
  %s4 = inlined_call_operand.vmem [shape: f32[32,1], index: 4, kind: input, shape index: {}]
  %s5 = inlined_call_operand.vmem [shape: f32[32,1], index: 5, kind: input, shape index: {}]
  %s6 = inlined_call_operand.<no memory space> [shape: f32[1], index: 6, kind: input, shape index: {}]
  %s7 = inlined_call_operand.hbm [shape: f32[1,128], index: 7, kind: output, shape index: {}]
  %s8 = sld [smem:[#allocation0]]
  $region38: #{tpu_custom_call.1} parent=0
    _
  %s10 = ssub.s32 1, %s8
  %s11 = scalar_select 0, %s10, %s8
  %12 = sst [smem:[#allocation2]] %s6
  $region1: #{tpu_custom_call.1} parent=0
    #allocation3 [shape = 'u8[512]{0}', space=vmem, size = 0x400, scoped, tag = 'output window, operand 0, single buffered']
    #allocation4 [shape = 's32[1]{0}', space=sflag, size = 0x4, scoped, tag = 'scoped memory for tpu_custom_call.1']
    %13 = vsyncpa [#allocation4], 0
    // Predicated region
    $region2: #{tpu_custom_call.1} parent=1 // pred_check
      _
    $region3: #{tpu_custom_call.1} parent=1 // pred_check_branch
      %15 = sbr.rel (0) target = $region5
    $region4: #{tpu_custom_call.1} parent=1 // pred_region
      _
    $region5: #{tpu_custom_call.1} parent=1 // pred_fallthru
      _
    // Predicated region
    $region6: #{tpu_custom_call.1} parent=1 // pred_check
      _
    $region7: #{tpu_custom_call.1} parent=1 // pred_check_branch
      %17 = sbr.rel (0) target = $region9
    $region8: #{tpu_custom_call.1} parent=1 // pred_region
      _
    $region9: #{tpu_custom_call.1} parent=1 // pred_fallthru
      _
    // Predicated region
    $region10: #{tpu_custom_call.1} parent=1 // pred_check
      _
    $region11: #{tpu_custom_call.1} parent=1 // pred_check_branch
      %19 = sbr.rel (0) target = $region13
    $region12: #{tpu_custom_call.1} parent=1 // pred_region
      _
    $region13: #{tpu_custom_call.1} parent=1 // pred_fallthru
      _
    // Predicated region
    $region14: #{tpu_custom_call.1} parent=1 // pred_check
      _
    $region15: #{tpu_custom_call.1} parent=1 // pred_check_branch
      %21 = sbr.rel (0) target = $region17
    $region16: #{tpu_custom_call.1} parent=1 // pred_region
      _
    $region17: #{tpu_custom_call.1} parent=1 // pred_fallthru
      _
    // Predicated region
    $region18: #{tpu_custom_call.1} parent=1 // pred_check
      _
    $region19: #{tpu_custom_call.1} parent=1 // pred_check_branch
      %23 = sbr.rel (0) target = $region21
    $region20: #{tpu_custom_call.1} parent=1 // pred_region
      _
    $region21: #{tpu_custom_call.1} parent=1 // pred_fallthru
      _
    // Predicated region
    $region22: #{tpu_custom_call.1} parent=1 // pred_check
      _
    $region23: #{tpu_custom_call.1} parent=1 // pred_check_branch
      %25 = sbr.rel (0) target = $region25
    $region24: #{tpu_custom_call.1} parent=1 // pred_region
      _
    $region25: #{tpu_custom_call.1} parent=1 // pred_fallthru
      _
    // Predicated region
    $region26: #{tpu_custom_call.1} parent=1 // pred_check
      _
    $region27: #{tpu_custom_call.1} parent=1 // pred_check_branch
      %27 = sbr.rel (0) target = $region29
    $region28: #{tpu_custom_call.1} parent=1 // pred_region
      _
    $region29: #{tpu_custom_call.1} parent=1 // pred_fallthru
      _
    %v28 = vld [vmem:[%s1] sm:$0xff]
    %v29 = vld [vmem:[%s1 + $0x8] sm:$0xff]
    %v30 = vld [vmem:[%s1 + $0x10] sm:$0xff]
    %v31 = vld [vmem:[%s1 + $0x18] sm:$0xff]
    %v32 = vld [vmem:[%s1 + $0x20] sm:$0xff]
    %v33 = vld [vmem:[%s1 + $0x28] sm:$0xff]
    %v34 = vld [vmem:[%s1 + $0x30] sm:$0xff]
    %v35 = vld [vmem:[%s1 + $0x38] sm:$0xff]
    %v36 = vld [vmem:[%s2] sm:$0xff]
    %v37 = vld [vmem:[%s2 + $0x8] sm:$0xff]
    %v38 = vld [vmem:[%s2 + $0x10] sm:$0xff]
    %v39 = vld [vmem:[%s2 + $0x18] sm:$0xff]
    %v40 = vld [vmem:[%s2 + $0x20] sm:$0xff]
    %v41 = vld [vmem:[%s2 + $0x28] sm:$0xff]
    %v42 = vld [vmem:[%s2 + $0x30] sm:$0xff]
    %v43 = vld [vmem:[%s2 + $0x38] sm:$0xff]
    %v44 = vld [vmem:[%s3] sm:$0xff]
    %v45 = vld [vmem:[%s3 + $0x8] sm:$0xff]
    %v46 = vld [vmem:[%s3 + $0x10] sm:$0xff]
    %v47 = vld [vmem:[%s3 + $0x18] sm:$0xff]
    %v48 = vld [vmem:[%s4] sm:$0xff]
    %v49 = vld [vmem:[%s4 + $0x8] sm:$0xff]
    %v50 = vld [vmem:[%s4 + $0x10] sm:$0xff]
    %v51 = vld [vmem:[%s4 + $0x18] sm:$0xff]
    %v52 = vld [vmem:[%s5] sm:$0xff]
    %v53 = vld [vmem:[%s5 + $0x8] sm:$0xff]
    %v54 = vld [vmem:[%s5 + $0x10] sm:$0xff]
    %v55 = vld [vmem:[%s5 + $0x18] sm:$0xff]
    %s56 = sld [smem:[#allocation2]]
    %v57 = vld [vmem:[%s0] sm:$0x7]
    %59 = vset.pattern.permute.xlu0 0
    %60 = vperm.xlu0 %59, %v28
    %v61 = vpop.permute.xlu0 %60
    %64 = vset.pattern.permute.xlu0 0
    %65 = vperm.xlu0 %64, %v29
    %v66 = vpop.permute.xlu0 %65
    %69 = vset.pattern.permute.xlu0 0
    %70 = vperm.xlu0 %69, %v30
    %v71 = vpop.permute.xlu0 %70
    %74 = vset.pattern.permute.xlu0 0
    %75 = vperm.xlu0 %74, %v31
    %v76 = vpop.permute.xlu0 %75
    %79 = vset.pattern.permute.xlu0 0
    %80 = vperm.xlu0 %79, %v32
    %v81 = vpop.permute.xlu0 %80
    %84 = vset.pattern.permute.xlu0 0
    %85 = vperm.xlu0 %84, %v33
    %v86 = vpop.permute.xlu0 %85
    %89 = vset.pattern.permute.xlu0 0
    %90 = vperm.xlu0 %89, %v34
    %v91 = vpop.permute.xlu0 %90
    %94 = vset.pattern.permute.xlu0 0
    %95 = vperm.xlu0 %94, %v35
    %v96 = vpop.permute.xlu0 %95
    %v98 = vlaneseq
    %v99 = vshrl.u32 %v98, 7
    %v100 = vsub.s32 0, %v99
    %v101 = vrot.slane %v57, %v100
    %v102 = vmul.f32 %v61, %v101
    %v103 = vmul.f32 %v66, %v101
    %v104 = vmul.f32 %v71, %v101
    %v105 = vmul.f32 %v76, %v101
    %v106 = vmul.f32 %v81, %v101
    %v107 = vmul.f32 %v86, %v101
    %v108 = vmul.f32 %v91, %v101
    %v109 = vmul.f32 %v96, %v101
    %110 = vset.pattern.permute.xlu0 1
    %111 = vperm.xlu0 %110, %v28
    %v112 = vpop.permute.xlu0 %111
    %114 = vset.pattern.permute.xlu0 1
    %115 = vperm.xlu0 %114, %v29
    %v116 = vpop.permute.xlu0 %115
    %118 = vset.pattern.permute.xlu0 1
    %119 = vperm.xlu0 %118, %v30
    %v120 = vpop.permute.xlu0 %119
    %122 = vset.pattern.permute.xlu0 1
    %123 = vperm.xlu0 %122, %v31
    %v124 = vpop.permute.xlu0 %123
    %126 = vset.pattern.permute.xlu0 1
    %127 = vperm.xlu0 %126, %v32
    %v128 = vpop.permute.xlu0 %127
    %130 = vset.pattern.permute.xlu0 1
    %131 = vperm.xlu0 %130, %v33
    %v132 = vpop.permute.xlu0 %131
    %134 = vset.pattern.permute.xlu0 1
    %135 = vperm.xlu0 %134, %v34
    %v136 = vpop.permute.xlu0 %135
    %138 = vset.pattern.permute.xlu0 1
    %139 = vperm.xlu0 %138, %v35
    %v140 = vpop.permute.xlu0 %139
    %v142 = vlaneseq
    %v143 = vshrl.u32 %v142, 7
    %v144 = vsub.s32 1, %v143
    %v145 = vrot.slane %v57, %v144
    %v146 = vmul.f32 %v112, %v145
    %v147 = vmul.f32 %v116, %v145
    %v148 = vmul.f32 %v120, %v145
    %v149 = vmul.f32 %v124, %v145
    %v150 = vmul.f32 %v128, %v145
    %v151 = vmul.f32 %v132, %v145
    %v152 = vmul.f32 %v136, %v145
    %v153 = vmul.f32 %v140, %v145
    %v154 = vadd.f32 %v102, %v146
    %v155 = vadd.f32 %v103, %v147
    %v156 = vadd.f32 %v104, %v148
    %v157 = vadd.f32 %v105, %v149
    %v158 = vadd.f32 %v106, %v150
    %v159 = vadd.f32 %v107, %v151
    %v160 = vadd.f32 %v108, %v152
    %v161 = vadd.f32 %v109, %v153
    %162 = vset.pattern.permute.xlu0 2
    %163 = vperm.xlu0 %162, %v28
    %v164 = vpop.permute.xlu0 %163
    %166 = vset.pattern.permute.xlu0 2
    %167 = vperm.xlu0 %166, %v29
    %v168 = vpop.permute.xlu0 %167
    %170 = vset.pattern.permute.xlu0 2
    %171 = vperm.xlu0 %170, %v30
    %v172 = vpop.permute.xlu0 %171
    %174 = vset.pattern.permute.xlu0 2
    %175 = vperm.xlu0 %174, %v31
    %v176 = vpop.permute.xlu0 %175
    %178 = vset.pattern.permute.xlu0 2
    %179 = vperm.xlu0 %178, %v32
    %v180 = vpop.permute.xlu0 %179
    %182 = vset.pattern.permute.xlu0 2
    %183 = vperm.xlu0 %182, %v33
    %v184 = vpop.permute.xlu0 %183
    %186 = vset.pattern.permute.xlu0 2
    %187 = vperm.xlu0 %186, %v34
    %v188 = vpop.permute.xlu0 %187
    %190 = vset.pattern.permute.xlu0 2
    %191 = vperm.xlu0 %190, %v35
    %v192 = vpop.permute.xlu0 %191
    %v194 = vlaneseq
    %v195 = vshrl.u32 %v194, 7
    %v196 = vsub.s32 2, %v195
    %v197 = vrot.slane %v57, %v196
    %v198 = vmul.f32 %v164, %v197
    %v199 = vmul.f32 %v168, %v197
    %v200 = vmul.f32 %v172, %v197
    %v201 = vmul.f32 %v176, %v197
    %v202 = vmul.f32 %v180, %v197
    %v203 = vmul.f32 %v184, %v197
    %v204 = vmul.f32 %v188, %v197
    %v205 = vmul.f32 %v192, %v197
    %v206 = vadd.f32 %v154, %v198
    %v207 = vadd.f32 %v155, %v199
    %v208 = vadd.f32 %v156, %v200
    %v209 = vadd.f32 %v157, %v201
    %v210 = vadd.f32 %v158, %v202
    %v211 = vadd.f32 %v159, %v203
    %v212 = vadd.f32 %v160, %v204
    %v213 = vadd.f32 %v161, %v205
    %215 = vset.pattern.permute.xlu0 0
    %216 = vperm.xlu0 %215, %v36
    %v217 = vpop.permute.xlu0 %216
    %220 = vset.pattern.permute.xlu0 0
    %221 = vperm.xlu0 %220, %v37
    %v222 = vpop.permute.xlu0 %221
    %225 = vset.pattern.permute.xlu0 0
    %226 = vperm.xlu0 %225, %v38
    %v227 = vpop.permute.xlu0 %226
    %230 = vset.pattern.permute.xlu0 0
    %231 = vperm.xlu0 %230, %v39
    %v232 = vpop.permute.xlu0 %231
    %235 = vset.pattern.permute.xlu0 0
    %236 = vperm.xlu0 %235, %v40
    %v237 = vpop.permute.xlu0 %236
    %240 = vset.pattern.permute.xlu0 0
    %241 = vperm.xlu0 %240, %v41
    %v242 = vpop.permute.xlu0 %241
    %245 = vset.pattern.permute.xlu0 0
    %246 = vperm.xlu0 %245, %v42
    %v247 = vpop.permute.xlu0 %246
    %250 = vset.pattern.permute.xlu0 0
    %251 = vperm.xlu0 %250, %v43
    %v252 = vpop.permute.xlu0 %251
    %v254 = vadd.f32 %v206, %v217
    %v255 = vadd.f32 %v207, %v222
    %v256 = vadd.f32 %v208, %v227
    %v257 = vadd.f32 %v209, %v232
    %v258 = vadd.f32 %v210, %v237
    %v259 = vadd.f32 %v211, %v242
    %v260 = vadd.f32 %v212, %v247
    %v261 = vadd.f32 %v213, %v252
    %v262 = vmax.f32 %v254, 0.0
    %v263 = vmax.f32 %v255, 0.0
    %v264 = vmax.f32 %v256, 0.0
    %v265 = vmax.f32 %v257, 0.0
    %v266 = vmax.f32 %v258, 0.0
    %v267 = vmax.f32 %v259, 0.0
    %v268 = vmax.f32 %v260, 0.0
    %v269 = vmax.f32 %v261, 0.0
    %271 = vset.pattern.permute.xlu0 0
    %272 = vperm.xlu0 %271, %v48
    %v273 = vpop.permute.xlu0 %272
    %276 = vset.pattern.permute.xlu0 0
    %277 = vperm.xlu0 %276, %v49
    %v278 = vpop.permute.xlu0 %277
    %281 = vset.pattern.permute.xlu0 0
    %282 = vperm.xlu0 %281, %v50
    %v283 = vpop.permute.xlu0 %282
    %286 = vset.pattern.permute.xlu0 0
    %287 = vperm.xlu0 %286, %v51
    %v288 = vpop.permute.xlu0 %287
    %vm290 = vcmask 523264
    %v292 = vsel %vm290, %v44, 0
    %v295 = vsel %vm290, %v45, 0
    %v298 = vsel %vm290, %v46, 0
    %v301 = vsel %vm290, %v47, 0
    %303 = vmatprep.subr.mxu0 0.0
    %304 = vmatpush1.msra.mxu0 0.0
    %305 = vmatprep.subr.mxu0 0.0
    %306 = vmatpush1.msra.mxu0 0.0
    %307 = vmatprep.subr.mxu0 0.0
    %308 = vmatpush1.msra.mxu0 0.0
    %309 = vmatprep.subr.mxu0 0.0
    %310 = vmatpush1.msra.mxu0 0.0
    %311 = vmatprep.subr.mxu0 0.0
    %312 = vmatpush1.msra.mxu0 0.0
    %313 = vmatprep.subr.mxu0 0.0
    %314 = vmatpush1.msra.mxu0 0.0
    %315 = vmatprep.subr.mxu0 0.0
    %316 = vmatpush1.msra.mxu0 0.0
    %317 = vmatprep.subr.mxu0 0.0
    %318 = vmatpush1.msra.mxu0 0.0
    %319 = vmatprep.subr.mxu0 0.0
    %320 = vmatpush1.msra.mxu0 %v269
    %321 = vmatprep.subr.mxu0 0.0
    %322 = vmatpush1.msra.mxu0 %v268
    %323 = vmatprep.subr.mxu0 0.0
    %324 = vmatpush1.msra.mxu0 %v267
    %325 = vmatprep.subr.mxu0 0.0
    %326 = vmatpush1.msra.mxu0 %v266
    %327 = vmatprep.subr.mxu0 0.0
    %328 = vmatpush1.msra.mxu0 %v265
    %329 = vmatprep.subr.mxu0 0.0
    %330 = vmatpush1.msra.mxu0 %v264
    %331 = vmatprep.subr.mxu0 0.0
    %332 = vmatpush1.msra.mxu0 %v263
    %333 = vmatprep.subr.mxu0 0.0
    %334 = vmatpush1.msra.mxu0 %v262
    %335 = vmatprep.subr.mxu0 0.0
    %336 = vmatpush2.msra.mxu0 0.0
    %337 = vmatprep.subr.mxu0 0.0
    %338 = vmatpush2.msra.mxu0 0.0
    %339 = vmatprep.subr.mxu0 0.0
    %340 = vmatpush2.msra.mxu0 0.0
    %341 = vmatprep.subr.mxu0 0.0
    %342 = vmatpush2.msra.mxu0 0.0
    %343 = vmatprep.subr.mxu0 0.0
    %344 = vmatpush2.msra.mxu0 0.0
    %345 = vmatprep.subr.mxu0 0.0
    %346 = vmatpush2.msra.mxu0 0.0
    %347 = vmatprep.subr.mxu0 0.0
    %348 = vmatpush2.msra.mxu0 0.0
    %349 = vmatprep.subr.mxu0 0.0
    %350 = vmatpush2.msra.mxu0 0.0
    %351 = vmatprep.subr.mxu0 0.0
    %352 = vmatpush2.msra.mxu0 0.0
    %353 = vmatprep.subr.mxu0 0.0
    %354 = vmatpush2.msra.mxu0 0.0
    %355 = vmatprep.subr.mxu0 0.0
    %356 = vmatpush2.msra.mxu0 0.0
    %357 = vmatprep.subr.mxu0 0.0
    %358 = vmatpush2.msra.mxu0 0.0
    %359 = vmatprep.subr.mxu0 0.0
    %360 = vmatpush2.msra.mxu0 0.0
    %361 = vmatprep.subr.mxu0 0.0
    %362 = vmatpush2.msra.mxu0 0.0
    %363 = vmatprep.subr.mxu0 0.0
    %364 = vmatpush2.msra.mxu0 0.0
    %365 = vmatprep.subr.mxu0 0.0
    %366 = vmatpush2.msra.mxu0 0.0
    %367 = vmatprep.mubr.f32.mxu0 0.0
    %368 = vmatmul.mubr.f32.gmra.mxu0 %v292
    %v369 = vpop.f32.mrf.mxu0
    %v370 = vadd.f32 %v273, %v369
    %v371 = vpop.f32.mrf.mxu0
    %372 = vmatprep.mubr.f32.mxu0 0.0
    %373 = vmatmul.mubr.f32.gmra.mxu0 %v295
    %v374 = vpop.f32.mrf.mxu0
    %v375 = vadd.f32 %v278, %v374
    %v376 = vpop.f32.mrf.mxu0
    %377 = vmatprep.mubr.f32.mxu0 0.0
    %378 = vmatmul.mubr.f32.gmra.mxu0 %v298
    %v379 = vpop.f32.mrf.mxu0
    %v380 = vadd.f32 %v283, %v379
    %v381 = vpop.f32.mrf.mxu0
    %382 = vmatprep.mubr.f32.mxu0 0.0
    %383 = vmatmul.mubr.f32.gmra.mxu0 %v301
    %v384 = vpop.f32.mrf.mxu0
    %v385 = vadd.f32 %v288, %v384
    %v386 = vpop.f32.mrf.mxu0
    %387 = vdwg.mxu0
    %v388 = vmax.f32 %v370, 0.0
    %v389 = vmax.f32 %v375, 0.0
    %v390 = vmax.f32 %v380, 0.0
    %v391 = vmax.f32 %v385, 0.0
    %393 = vset.pattern.permute.xlu0 0
    %394 = vperm.xlu0 %393, %v52
    %v395 = vpop.permute.xlu0 %394
    %398 = vset.pattern.permute.xlu0 0
    %399 = vperm.xlu0 %398, %v53
    %v400 = vpop.permute.xlu0 %399
    %403 = vset.pattern.permute.xlu0 0
    %404 = vperm.xlu0 %403, %v54
    %v405 = vpop.permute.xlu0 %404
    %408 = vset.pattern.permute.xlu0 0
    %409 = vperm.xlu0 %408, %v55
    %v410 = vpop.permute.xlu0 %409
    %v412 = vmul.f32 %v395, %v388
    %v413 = vmul.f32 %v400, %v389
    %v414 = vmul.f32 %v405, %v390
    %v415 = vmul.f32 %v410, %v391
    %v416 = vadd.f32 %v412, %v413
    %v417 = vadd.f32 %v416, %v414
    %v418 = vadd.f32 %v417, %v415
    %v419 = vrot.slane %v418, 4
    %v420 = vadd.f32 %v418, %v419
    %v421 = vrot.slane %v420, 2
    %v422 = vadd.f32 %v420, %v421
    %v423 = vrot.slane %v422, 1
    %v424 = vadd.f32 %v422, %v423
    %v425 = vstv %s56
    %v426 = vadd.f32 %v424, %v425
    %v427 = vand.u32 2147483647, %v426
    %v428 = vsub.f32 0.0, %v427
    %v429 = vmul.f32 %v428, 1.442695
    %v430 = vpow.pop %v429
    %v431 = vadd.f32 %v430, 1.0
    %v432 = vrcp.pop %v431
    %v433 = vmul.f32 1.0, %v432
    %vm434 = vcmp.ge.f32.partialorder %v426, 0.0
    %v435 = vmul.f32 %v430, %v433
    %v436 = vsel %vm434, %v433, %v435
    %437 = vst [vmem:[#allocation3] sm:$0x1] %v436
    // Predicated region
    $region30: #{tpu_custom_call.1} parent=1 // pred_check
      _
    $region31: #{tpu_custom_call.1} parent=1 // pred_check_branch
      %439 = sbr.rel (0) target = $region33
    $region32: #{tpu_custom_call.1} parent=1 // pred_region
      %s441 = ssub.s32 16, 16
      %442 = vsyncadd [#allocation4], %s441
      %s444 = sshll.u32 [#allocation3], 4
      %s445 = int_to_ptr.vmem [resolvable:$true] %s444
      %447 = dma.vmem_to_hbm [thread:$0]  %s445, 16, %s7, [#allocation4]
    $region33: #{tpu_custom_call.1} parent=1 // pred_fallthru
      _
    // Predicated region
    $region34: #{tpu_custom_call.1} parent=1 // pred_check
      _
    $region35: #{tpu_custom_call.1} parent=1 // pred_check_branch
      %449 = sbr.rel (0) target = $region37
    $region36: #{tpu_custom_call.1} parent=1 // pred_region
      %450 = dma.done [#allocation4], 16
    $region37: #{tpu_custom_call.1} parent=1 // pred_fallthru
      _
    %451 = vsyncpa [#allocation4], 1

</llo_original>
